<compile_context>
chip_gen: v7x
topology: tpu7x:2x2x1
jax: 0.10.0
libtpu: 0.0.40
codegen_flags: <defaults>
</compile_context>

<pallas_src>
import jax
import jax.numpy as jnp
from jax.experimental import pallas as pl
from jax.experimental.pallas import tpu as pltpu


def _round_up(n, m):
    return ((n + m - 1) // m) * m


def _classifier_kernel(x_ref, w1_ref, b1_ref, w2_ref, b2_ref, o_ref):
    # One batch tile per grid step:
    #   (tb, D) @ (D, Hp) -> +bias -> ReLU -> (tb, Hp) @ (Hp, Cp) -> +bias.
    x = x_ref[...]                                                     # native dtype (f32/bf16)
    h = jnp.dot(x, w1_ref[...], preferred_element_type=jnp.float32)    # MXU, f32 accumulate
    h = jnp.maximum(h + b1_ref[...].astype(jnp.float32), 0.0)          # bias + ReLU on VPU
    h = h.astype(w2_ref.dtype)                                         # keep MXU operand dtypes matched
    y = jnp.dot(h, w2_ref[...], preferred_element_type=jnp.float32)    # MXU, f32 accumulate
    y = y + b2_ref[...].astype(jnp.float32)
    o_ref[...] = y.astype(o_ref.dtype)


def prepare_params(w1, b1, w2, b2):
    """Pad weights/biases ONCE to lane-dense hidden/class dims (multiples of 128).

    Zero-padded weight columns/rows and zero biases contribute nothing, so the
    valid output columns are unchanged. Call this at init time, not per forward.
    """
    D, H = w1.shape
    C = w2.shape[1]
    b1 = b1.reshape(1, H)
    b2 = b2.reshape(1, C)
    Hp = _round_up(H, 128)
    Cp = _round_up(C, 128)
    if Hp != H:
        w1 = jnp.pad(w1, ((0, 0), (0, Hp - H)))
        b1 = jnp.pad(b1, ((0, 0), (0, Hp - H)))
        w2 = jnp.pad(w2, ((0, Hp - H), (0, 0)))
    if Cp != C:
        w2 = jnp.pad(w2, ((0, 0), (0, Cp - C)))
        b2 = jnp.pad(b2, ((0, 0), (0, Cp - C)))
    return {"w1": w1, "b1": b1, "w2": w2, "b2": b2, "num_classes": C}


def classifier_forward(x, params, *, block_b=1024, min_pallas_rows=64, out_dtype=None):
    """Forward pass of Classifier: ReLU(x @ w1 + b1) @ w2 + b2.

    x: (B, D). `params` comes from `prepare_params` (weights already lane-padded).
    """
    w1, b1, w2, b2 = params["w1"], params["b1"], params["w2"], params["b2"]
    C = params["num_classes"]
    B, D = x.shape
    Hp = w1.shape[1]
    Cp = w2.shape[1]
    out_dtype = x.dtype if out_dtype is None else out_dtype

    # Toy batches: compute is <1us, pallas_call launch + DMA setup is several us —
    # let XLA fuse the two dots + ReLU instead.
    if B < min_pallas_rows:
        h = jnp.maximum(x @ w1 + b1, 0.0)
        return ((h @ w2 + b2)[:, :C]).astype(out_dtype)

    x_item = x.dtype.itemsize
    w_item = w1.dtype.itemsize
    o_item = jnp.dtype(out_dtype).itemsize

    # Batch tile: multiple of 8 (f32) / 16 (bf16) for sublane packing, capped so
    # the grid has >= 2 steps (v7x megacore: one TC idles on a 1-step grid), and
    # shrunk until the per-step VMEM footprint fits the budget.
    mult = 16 if x_item == 2 else 8
    tb = _round_up(max(min(block_b, B), mult), mult)
    if B >= 2 * mult:
        tb = min(tb, _round_up(-(-B // 2), mult))

    weight_bytes = (w1.size + b1.size + w2.size + b2.size) * w_item  # single-buffered

    def footprint(t):
        return (2 * t * D * x_item          # x tile, double-buffered
                + 2 * t * Cp * o_item       # out tile, double-buffered
                + t * Hp * 4                # f32 hidden intermediate
                + weight_bytes)

    vmem_budget = 28 << 20                  # conservative across v5e/v6e/v7x
    while tb > mult and footprint(tb) > vmem_budget:
        tb = max(mult, _round_up(tb // 2, mult))

    grid = (pl.cdiv(B, tb),)                # ragged last tile: junk rows are masked on store
    vmem_limit = int(min(max(2 * footprint(tb), 32 << 20), 48 << 20))

    out = pl.pallas_call(
        _classifier_kernel,
        out_shape=jax.ShapeDtypeStruct((B, Cp), out_dtype),
        grid=grid,
        in_specs=[
            # Streamed batch tile (default double-buffered pipelining).
            pl.BlockSpec((tb, D), lambda i: (i, 0)),
            # VMEM-resident across grid steps; constant index_map -> single buffer.
            pl.BlockSpec((D, Hp), lambda i: (0, 0), pipeline_mode=pl.Buffered(1)),
            pl.BlockSpec((1, Hp), lambda i: (0, 0), pipeline_mode=pl.Buffered(1)),
            pl.BlockSpec((Hp, Cp), lambda i: (0, 0), pipeline_mode=pl.Buffered(1)),
            pl.BlockSpec((1, Cp), lambda i: (0, 0), pipeline_mode=pl.Buffered(1)),
        ],
        out_specs=pl.BlockSpec((tb, Cp), lambda i: (i, 0)),
        compiler_params=pltpu.CompilerParams(
            # Batch tiles are independent: shard across TensorCores (v7x megacore).
            dimension_semantics=("parallel",),
            vmem_limit_bytes=vmem_limit,
        ),
    )(x, w1, b1, w2, b2)
    return out[:, :C]


def init_params(key, feature_dim, num_classes, dtype=jnp.float32):
    """Deterministic init mimicking PyTorch nn.Linear default (uniform +/- 1/sqrt(fan_in))."""
    hidden = feature_dim // 2
    k1, k2, k3, k4 = jax.random.split(key, 4)
    bound1 = 1.0 / jnp.sqrt(feature_dim)
    bound2 = 1.0 / jnp.sqrt(hidden)
    w1 = jax.random.uniform(k1, (feature_dim, hidden), dtype, -bound1, bound1)
    b1 = jax.random.uniform(k2, (1, hidden), dtype, -bound1, bound1)
    w2 = jax.random.uniform(k3, (hidden, num_classes), dtype, -bound2, bound2)
    b2 = jax.random.uniform(k4, (1, num_classes), dtype, -bound2, bound2)
    return w1, b1, w2, b2


def reference_forward(x, w1, b1, w2, b2):
    h = jnp.maximum(x @ w1 + b1, 0.0)
    return h @ w2 + b2


if __name__ == "__main__":
    # Small shapes consistent with the module (Linear(D -> D//2) -> ReLU -> Linear -> C).
    batch = 200            # not a multiple of the tile: exercises the ragged last tile
    feature_dim = 256      # hidden = 128, already lane-aligned
    num_classes = 11       # padded to 128 lanes inside prepare_params

    key = jax.random.PRNGKey(0)
    kx, kp = jax.random.split(key)
    x = jax.random.normal(kx, (batch, feature_dim), jnp.float32)
    w1, b1, w2, b2 = init_params(kp, feature_dim, num_classes)

    params = prepare_params(w1, b1, w2, b2)   # pad weights once, outside the per-call path

    # block_b=128 -> tb is capped to ceil(B/2)=104 rows -> grid=(2,): exercises
    # batch streaming + megacore-friendly multi-step grid + ragged tail.
    out = classifier_forward(x, params, block_b=128)
    out = jax.block_until_ready(out)

    ref = reference_forward(x, w1, b1, w2, b2)
    assert out.shape == (batch, num_classes)
    assert jnp.allclose(out, ref, atol=1e-3, rtol=1e-3), "mismatch vs JAX reference"

    print("KERNEL_OK")
</pallas_src>

<mosaic_0001>
module attributes {stable_mosaic.version = 11 : i64} {
  func.func @_classifier_kernel(%arg0: i32, %arg1: memref<104x256xf32, #tpu.memory_space<vmem>>, %arg2: memref<256x128xf32, #tpu.memory_space<vmem>>, %arg3: memref<1x128xf32, #tpu.memory_space<vmem>>, %arg4: memref<128x128xf32, #tpu.memory_space<vmem>>, %arg5: memref<1x128xf32, #tpu.memory_space<vmem>>, %arg6: memref<104x128xf32, #tpu.memory_space<vmem>>) attributes {dimension_semantics = [#tpu.dimension_semantics<parallel>], iteration_bounds = array<i64: 2>, scalar_prefetch = 0 : i64, scratch_operands = 0 : i64, tpu.core_type = #tpu.core_type<tc>, window_params = [{transform_indices = @transform_0, window_bounds = array<i64: 104, 256>}, {pipeline_mode = #tpu.pipeline_mode<synchronous>, transform_indices = @transform_1, window_bounds = array<i64: 256, 128>}, {pipeline_mode = #tpu.pipeline_mode<synchronous>, transform_indices = @transform_2, window_bounds = array<i64: 1, 128>}, {pipeline_mode = #tpu.pipeline_mode<synchronous>, transform_indices = @transform_3, window_bounds = array<i64: 128, 128>}, {pipeline_mode = #tpu.pipeline_mode<synchronous>, transform_indices = @transform_4, window_bounds = array<i64: 1, 128>}, {transform_indices = @transform_5, window_bounds = array<i64: 104, 128>}]} {
    %c0 = arith.constant 0 : index
    %c0_0 = arith.constant 0 : index
    %0 = vector.load %arg1[%c0, %c0_0] : memref<104x256xf32, #tpu.memory_space<vmem>>, vector<104x256xf32>
    %c0_1 = arith.constant 0 : index
    %c0_2 = arith.constant 0 : index
    %1 = vector.load %arg2[%c0_1, %c0_2] : memref<256x128xf32, #tpu.memory_space<vmem>>, vector<256x128xf32>
    %cst = arith.constant dense<0.000000e+00> : vector<104x128xf32>
    %2 = tpu.matmul %0, %1, %cst {dimension_numbers = #tpu.dot_dimension_numbers<[1], [0], [0], [1], [0, 0, 1, 1], [], []>} : vector<104x256xf32>, vector<256x128xf32>, vector<104x128xf32> -> vector<104x128xf32>
    %c0_3 = arith.constant 0 : index
    %c0_4 = arith.constant 0 : index
    %3 = vector.load %arg3[%c0_3, %c0_4] : memref<1x128xf32, #tpu.memory_space<vmem>>, vector<1x128xf32>
    %4 = vector.broadcast %3 : vector<1x128xf32> to vector<104x128xf32>
    %5 = arith.addf %2, %4 : vector<104x128xf32>
    %cst_5 = arith.constant 0.000000e+00 : f32
    %6 = vector.broadcast %cst_5 : f32 to vector<104x128xf32>
    %7 = arith.maximumf %5, %6 : vector<104x128xf32>
    %c0_6 = arith.constant 0 : index
    %c0_7 = arith.constant 0 : index
    %8 = vector.load %arg4[%c0_6, %c0_7] : memref<128x128xf32, #tpu.memory_space<vmem>>, vector<128x128xf32>
    %cst_8 = arith.constant dense<0.000000e+00> : vector<104x128xf32>
    %9 = tpu.matmul %7, %8, %cst_8 {dimension_numbers = #tpu.dot_dimension_numbers<[1], [0], [0], [1], [0, 0, 1, 1], [], []>} : vector<104x128xf32>, vector<128x128xf32>, vector<104x128xf32> -> vector<104x128xf32>
    %c0_9 = arith.constant 0 : index
    %c0_10 = arith.constant 0 : index
    %10 = vector.load %arg5[%c0_9, %c0_10] : memref<1x128xf32, #tpu.memory_space<vmem>>, vector<1x128xf32>
    %11 = vector.broadcast %10 : vector<1x128xf32> to vector<104x128xf32>
    %12 = arith.addf %9, %11 : vector<104x128xf32>
    %c0_11 = arith.constant 0 : index
    %c0_12 = arith.constant 0 : index
    %13 = vector.load %arg6[%c0_11, %c0_12] : memref<104x128xf32, #tpu.memory_space<vmem>>, vector<104x128xf32>
    tpu.vector_store %arg6[%c0_11, %c0_12], %12 {strides = array<i32>} : memref<104x128xf32, #tpu.memory_space<vmem>>, vector<104x128xf32>,
    return
  }
  func.func @transform_0(%arg0: i32) -> (i32, i32) {
    %c0_i32 = arith.constant 0 : i32
    %c0_i32_0 = arith.constant 0 : i32
    return %arg0, %c0_i32 : i32, i32
  }
  func.func @transform_1(%arg0: i32) -> (i32, i32) {
    %c0_i32 = arith.constant 0 : i32
    %c0_i32_0 = arith.constant 0 : i32
    %c0_i32_1 = arith.constant 0 : i32
    return %c0_i32, %c0_i32_0 : i32, i32
  }
  func.func @transform_2(%arg0: i32) -> (i32, i32) {
    %c0_i32 = arith.constant 0 : i32
    %c0_i32_0 = arith.constant 0 : i32
    %c0_i32_1 = arith.constant 0 : i32
    return %c0_i32, %c0_i32_0 : i32, i32
  }
  func.func @transform_3(%arg0: i32) -> (i32, i32) {
    %c0_i32 = arith.constant 0 : i32
    %c0_i32_0 = arith.constant 0 : i32
    %c0_i32_1 = arith.constant 0 : i32
    return %c0_i32, %c0_i32_0 : i32, i32
  }
  func.func @transform_4(%arg0: i32) -> (i32, i32) {
    %c0_i32 = arith.constant 0 : i32
    %c0_i32_0 = arith.constant 0 : i32
    %c0_i32_1 = arith.constant 0 : i32
    return %c0_i32, %c0_i32_0 : i32, i32
  }
  func.func @transform_5(%arg0: i32) -> (i32, i32) {
    %c0_i32 = arith.constant 0 : i32
    %c0_i32_0 = arith.constant 0 : i32
    return %arg0, %c0_i32 : i32, i32
  }
}

</mosaic_0001>

<llo_original>
// kernel: tpu_custom_call.1
$region0: #{tpu_custom_call.1}
  #allocation0 [shape = 'u32[]', space=smem, size = 0x4, offset = 0x4, fixed_abs, tag = 'smem constant byte address 0x4 - core index']
  #allocation1 [shape = 'u32[144,128]{1,0:T(1,128)}', space=vmem, size = 0x12000, scoped, tag = 'internal scratch']
  %s0 = inlined_call_operand.hbm [shape: f32[200,256], index: 0, kind: input, shape index: {}]
  %s1 = inlined_call_operand.hbm [shape: f32[256,128], index: 1, kind: input, shape index: {}]
  %s2 = inlined_call_operand.vmem [shape: f32[1,128], index: 2, kind: input, shape index: {}]
  %s3 = inlined_call_operand.hbm [shape: f32[128,128], index: 3, kind: input, shape index: {}]
  %s4 = inlined_call_operand.vmem [shape: f32[1,128], index: 4, kind: input, shape index: {}]
  %s5 = inlined_call_operand.hbm [shape: f32[200,128], index: 5, kind: output, shape index: {}]
  %s6 = sld [smem:[#allocation0]]
  $region65: #{tpu_custom_call.1} parent=0
    _
  %s8 = ssub.s32 1, %s6
  %s9 = scalar_select 0, %s8, %s6
  $region1: #{tpu_custom_call.1} parent=0
    #allocation2 [shape = 'u8[212992]{0}', space=vmem, size = 0x34000, scoped, tag = 'input window, operand 0']
    #allocation3 [shape = 's32[2]{0}', space=sflag, size = 0x8, scoped, tag = 'scoped memory for tpu_custom_call.1']
    #allocation4 [shape = 's32[2]{0}', space=sflag, size = 0x8, scoped, tag = 'scoped memory for tpu_custom_call.1']
    #allocation5 [shape = 'u8[131072]{0}', space=vmem, size = 0x20000, scoped, tag = 'input window, operand 1, single buffered']
    #allocation6 [shape = 's32[1]{0}', space=sflag, size = 0x4, scoped, tag = 'scoped memory for tpu_custom_call.1']
    #allocation7 [shape = 'u8[65536]{0}', space=vmem, size = 0x10000, scoped, tag = 'input window, operand 3, single buffered']
    #allocation8 [shape = 'u8[106496]{0}', space=vmem, size = 0x1a000, scoped, tag = 'output window, operand 0']
    %10 = vsyncpa [#allocation3], 0
    %s11 = scalar_lea.sflag [#allocation3], 1
    %12 = vsyncpa %s11, 0
    %13 = vsyncpa [#allocation6], 0
    %14 = vsyncpa [#allocation4], 0
    %s15 = scalar_lea.sflag [#allocation4], 1
    %16 = vsyncpa %s15, 0
    loop: start=0, step=1, limit=4
    $region2: #{tpu_custom_call.1} parent=1 // loop_pre_header
      _
    $region3: #{tpu_custom_call.1} parent=1 // loop_header
      %s18 = sphi 0, %s22
      %p19 = scmp.ge.s32.totalorder %s18, 4
      %s28 = sphi 0, %s30
      %s31 = sphi 0, %s28
      %s32 = sphi 0, %s31
      %s48 = sphi 0, %s32
      %s52 = sphi 0, %s52
      %s54 = sphi 0, %s52
      %s55 = sphi 0, %s54
      %s69 = sphi 0, %s55
      %s73 = sphi 0, %s73
      %s75 = sphi 0, %s73
      %s76 = sphi 0, %s75
      %s90 = sphi 0, %s76
      %s94 = sphi 0, %s94
      %s96 = sphi 0, %s94
      %s97 = sphi 0, %s96
      %s111 = sphi 0, %s97
      %s115 = sphi 0, %s115
      %s117 = sphi 0, %s115
      %s118 = sphi 0, %s117
      %s132 = sphi 0, %s118
      %s138 = sphi 0, %s140
      %s141 = sphi 0, %s138
      %s142 = sphi 0, %s141
      %s158 = sphi 0, %s142
    $region4: #{tpu_custom_call.1} parent=1 // loop_header_branch
      %21 = sbr.rel (%p19) target = $region8
    $region5: #{tpu_custom_call.1} parent=1 // loop_body
      %s23 = ssub.s32 %s18, 1
      %s24 = ssub.s32 %s18, 2
      %s25 = sadd.s32 %s18, 1
      %s26 = ssub.s32 %s18, %s25
      %p27 = scmp.eq.s32.totalorder %s26, 0
      %s29 = sadd.s32 %s28, 1
      %s30 = scalar_select %p27, %s28, %s29
      %p33 = pneg %p27
      %p34 = scmp.eq.s32.totalorder %s18, 1
      %p35 = por %p33, %p34
      %p36 = scmp.ne.s32.totalorder %s28, %s31
      %p37 = scmp.eq.s32.totalorder %s18, 0
      %p38 = por %p36, %p37
      %p39 = scmp.ne.s32.totalorder %s28, %s31
      %p40 = scmp.eq.s32.totalorder %s23, 1
      %p41 = por %p39, %p40
      %p42 = scmp.ne.s32.totalorder %s31, %s32
      %p43 = scmp.eq.s32.totalorder %s23, 0
      %p44 = por %p42, %p43
      %p45 = scmp.ne.s32.totalorder %s31, %s32
      %p46 = scmp.eq.s32.totalorder %s24, 1
      %p47 = por %p45, %p46
      %p49 = scmp.ne.s32.totalorder %s32, %s48
      %p50 = scmp.eq.s32.totalorder %s24, 0
      %p51 = por %p49, %p50
      %s53 = sadd.s32 %s52, 1
      %p56 = scmp.eq.s32.totalorder %s18, 1
      %p57 = scmp.ne.s32.totalorder %s52, %s54
      %p58 = scmp.eq.s32.totalorder %s18, 0
      %p59 = por %p57, %p58
      %p60 = scmp.ne.s32.totalorder %s52, %s54
      %p61 = scmp.eq.s32.totalorder %s23, 1
      %p62 = por %p60, %p61
      %p63 = scmp.ne.s32.totalorder %s54, %s55
      %p64 = scmp.eq.s32.totalorder %s23, 0
      %p65 = por %p63, %p64
      %p66 = scmp.ne.s32.totalorder %s54, %s55
      %p67 = scmp.eq.s32.totalorder %s24, 1
      %p68 = por %p66, %p67
      %p70 = scmp.ne.s32.totalorder %s55, %s69
      %p71 = scmp.eq.s32.totalorder %s24, 0
      %p72 = por %p70, %p71
      %s74 = sadd.s32 %s73, 1
      %p77 = scmp.eq.s32.totalorder %s18, 1
      %p78 = scmp.ne.s32.totalorder %s73, %s75
      %p79 = scmp.eq.s32.totalorder %s18, 0
      %p80 = por %p78, %p79
      %p81 = scmp.ne.s32.totalorder %s73, %s75
      %p82 = scmp.eq.s32.totalorder %s23, 1
      %p83 = por %p81, %p82
      %p84 = scmp.ne.s32.totalorder %s75, %s76
      %p85 = scmp.eq.s32.totalorder %s23, 0
      %p86 = por %p84, %p85
      %p87 = scmp.ne.s32.totalorder %s75, %s76
      %p88 = scmp.eq.s32.totalorder %s24, 1
      %p89 = por %p87, %p88
      %p91 = scmp.ne.s32.totalorder %s76, %s90
      %p92 = scmp.eq.s32.totalorder %s24, 0
      %p93 = por %p91, %p92
      %s95 = sadd.s32 %s94, 1
      %p98 = scmp.eq.s32.totalorder %s18, 1
      %p99 = scmp.ne.s32.totalorder %s94, %s96
      %p100 = scmp.eq.s32.totalorder %s18, 0
      %p101 = por %p99, %p100
      %p102 = scmp.ne.s32.totalorder %s94, %s96
      %p103 = scmp.eq.s32.totalorder %s23, 1
      %p104 = por %p102, %p103
      %p105 = scmp.ne.s32.totalorder %s96, %s97
      %p106 = scmp.eq.s32.totalorder %s23, 0
      %p107 = por %p105, %p106
      %p108 = scmp.ne.s32.totalorder %s96, %s97
      %p109 = scmp.eq.s32.totalorder %s24, 1
      %p110 = por %p108, %p109
      %p112 = scmp.ne.s32.totalorder %s97, %s111
      %p113 = scmp.eq.s32.totalorder %s24, 0
      %p114 = por %p112, %p113
      %s116 = sadd.s32 %s115, 1
      %p119 = scmp.eq.s32.totalorder %s18, 1
      %p120 = scmp.ne.s32.totalorder %s115, %s117
      %p121 = scmp.eq.s32.totalorder %s18, 0
      %p122 = por %p120, %p121
      %p123 = scmp.ne.s32.totalorder %s115, %s117
      %p124 = scmp.eq.s32.totalorder %s23, 1
      %p125 = por %p123, %p124
      %p126 = scmp.ne.s32.totalorder %s117, %s118
      %p127 = scmp.eq.s32.totalorder %s23, 0
      %p128 = por %p126, %p127
      %p129 = scmp.ne.s32.totalorder %s117, %s118
      %p130 = scmp.eq.s32.totalorder %s24, 1
      %p131 = por %p129, %p130
      %p133 = scmp.ne.s32.totalorder %s118, %s132
      %p134 = scmp.eq.s32.totalorder %s24, 0
      %p135 = por %p133, %p134
      %s136 = ssub.s32 %s18, %s25
      %p137 = scmp.eq.s32.totalorder %s136, 0
      %s139 = sadd.s32 %s138, 1
      %s140 = scalar_select %p137, %s138, %s139
      %p143 = pneg %p137
      %p144 = scmp.eq.s32.totalorder %s18, 1
      %p145 = por %p143, %p144
      %p146 = scmp.ne.s32.totalorder %s138, %s141
      %p147 = scmp.eq.s32.totalorder %s18, 0
      %p148 = por %p146, %p147
      %p149 = scmp.ne.s32.totalorder %s138, %s141
      %p150 = scmp.eq.s32.totalorder %s23, 1
      %p151 = por %p149, %p150
      %p152 = scmp.ne.s32.totalorder %s141, %s142
      %p153 = scmp.eq.s32.totalorder %s23, 0
      %p154 = por %p152, %p153
      %p155 = scmp.ne.s32.totalorder %s141, %s142
      %p156 = scmp.eq.s32.totalorder %s24, 1
      %p157 = por %p155, %p156
      %p159 = scmp.ne.s32.totalorder %s142, %s158
      %p160 = scmp.eq.s32.totalorder %s24, 0
      %p161 = por %p159, %p160
      %p162 = scmp.le.s32.totalorder 1, %s18
      %p163 = scmp.lt.s32.totalorder %s18, 3
      %p164 = pnand %p162, %p163
      %p165 = pneg %p164
      // Predicated region
      $region9: #{tpu_custom_call.1} parent=5 // pred_check
        _
      $region10: #{tpu_custom_call.1} parent=5 // pred_check_branch
        %167 = sbr.rel (%p164) target = $region12
      $region11: #{tpu_custom_call.1} parent=5 // pred_region
        %s168 = ssub.s32 %s18, 1
        // Predicated region
        $region13: #{tpu_custom_call.1} parent=11 // pred_check
          %p169 = pneg %p65
        $region14: #{tpu_custom_call.1} parent=11 // pred_check_branch
          %171 = sbr.rel (%p169) target = $region16
        $region15: #{tpu_custom_call.1} parent=11 // pred_region
          %s173 = ssub.s32 4096, 4096
          %174 = vsyncadd [#allocation6], %s173
          %s175 = sshll.u32 [#allocation5], 4
          %s176 = int_to_ptr.vmem [resolvable:$true] %s175
          %181 = dma.hbm_to_vmem [thread:$0]  %s1, 4096, %s176, [#allocation6], 128, 128, 8
        $region16: #{tpu_custom_call.1} parent=11 // pred_fallthru
          _
        // Predicated region
        $region17: #{tpu_custom_call.1} parent=11 // pred_check
          %p182 = pneg %p86
        $region18: #{tpu_custom_call.1} parent=11 // pred_check_branch
          %184 = sbr.rel (%p182) target = $region20
        $region19: #{tpu_custom_call.1} parent=11 // pred_region
          _
        $region20: #{tpu_custom_call.1} parent=11 // pred_fallthru
          _
        // Predicated region
        $region21: #{tpu_custom_call.1} parent=11 // pred_check
          %p185 = pneg %p107
        $region22: #{tpu_custom_call.1} parent=11 // pred_check_branch
          %187 = sbr.rel (%p185) target = $region24
        $region23: #{tpu_custom_call.1} parent=11 // pred_region
          %s189 = ssub.s32 2048, 2048
          %190 = vsyncadd [#allocation6], %s189
          %s191 = sshll.u32 [#allocation7], 4
          %s192 = int_to_ptr.vmem [resolvable:$true] %s191
          %197 = dma.hbm_to_vmem [thread:$0]  %s3, 2048, %s192, [#allocation6], 128, 128, 8
        $region24: #{tpu_custom_call.1} parent=11 // pred_fallthru
          _
        // Predicated region
        $region25: #{tpu_custom_call.1} parent=11 // pred_check
          %p198 = pneg %p128
        $region26: #{tpu_custom_call.1} parent=11 // pred_check_branch
          %200 = sbr.rel (%p198) target = $region28
        $region27: #{tpu_custom_call.1} parent=11 // pred_region
          _
        $region28: #{tpu_custom_call.1} parent=11 // pred_fallthru
          _
      $region12: #{tpu_custom_call.1} parent=5 // pred_fallthru
        _
      %p201 = scmp.lt.s32.totalorder %s18, 2
      // Predicated region
      $region29: #{tpu_custom_call.1} parent=5 // pred_check
        %p202 = pneg %p201
      $region30: #{tpu_custom_call.1} parent=5 // pred_check_branch
        %204 = sbr.rel (%p202) target = $region32
      $region31: #{tpu_custom_call.1} parent=5 // pred_region
        // Predicated region
        $region33: #{tpu_custom_call.1} parent=31 // pred_check
          %p205 = pneg %p38
        $region34: #{tpu_custom_call.1} parent=31 // pred_check_branch
          %207 = sbr.rel (%p205) target = $region36
        $region35: #{tpu_custom_call.1} parent=31 // pred_region
          %s208 = sand.u32 %s28, 1
          %s209 = scalar_lea.sflag [#allocation3], %s208
          %s210 = sand.u32 %s28, 1
          %s211 = smul.addr %s210, 208
          %s212 = scalar_lea.vmem [#allocation2], %s211
          %s213 = smul.u32 13, %s18
          %s214 = ssub.s32 25, %s213
          %p215 = scmp.lt.s32.totalorder %s214, 13
          %s216 = scalar_select %p215, %s214, 13
          %s217 = smul.u32 128, %s216
          %s218 = smul.u32 %s217, 2
          %s220 = ssub.s32 3328, %s218
          %221 = vsyncadd %s209, %s220
          %p222 = scmp.ne.s32.totalorder 0, %s218
          %s223 = smul.addr %s213, 2
          %s224 = smul.addr %s223, 128
          %s225 = scalar_lea.hbm %s0, %s224
          %s226 = smul.u32 16, %s216
          %s227 = sshll.u32 %s212, 4
          %s228 = int_to_ptr.vmem [resolvable:$true] %s227
          %s229 = sshll.u32 %s226, 4
          %233 = dma.hbm_to_vmem [thread:$0]  (%p222), %s225, %s229, %s228, %s209, 256, 256, 16
        $region36: #{tpu_custom_call.1} parent=31 // pred_fallthru
          _
      $region32: #{tpu_custom_call.1} parent=5 // pred_fallthru
        _
      %p234 = scmp.le.s32.totalorder 1, %s18
      %p235 = scmp.lt.s32.totalorder %s18, 3
      %p236 = pnand %p234, %p235
      %p237 = pneg %p236
      // Predicated region
      $region37: #{tpu_custom_call.1} parent=5 // pred_check
        _
      $region38: #{tpu_custom_call.1} parent=5 // pred_check_branch
        %239 = sbr.rel (%p236) target = $region40
      $region39: #{tpu_custom_call.1} parent=5 // pred_region
        %s240 = ssub.s32 %s18, 1
        %s241 = sand.u32 %s31, 1
        %s242 = scalar_lea.sflag [#allocation3], %s241
        %s243 = sand.u32 %s31, 1
        %s244 = smul.addr %s243, 208
        %s245 = scalar_lea.vmem [#allocation2], %s244
        // Predicated region
        $region41: #{tpu_custom_call.1} parent=39 // pred_check
          %p246 = pneg %p44
        $region42: #{tpu_custom_call.1} parent=39 // pred_check_branch
          %248 = sbr.rel (%p246) target = $region44
        $region43: #{tpu_custom_call.1} parent=39 // pred_region
          %249 = dma.done %s242, 3328
        $region44: #{tpu_custom_call.1} parent=39 // pred_fallthru
          _
        // Predicated region
        $region45: #{tpu_custom_call.1} parent=39 // pred_check
          %p250 = pneg %p65
        $region46: #{tpu_custom_call.1} parent=39 // pred_check_branch
          %252 = sbr.rel (%p250) target = $region48
        $region47: #{tpu_custom_call.1} parent=39 // pred_region
          %253 = dma.done [#allocation6], 4096
        $region48: #{tpu_custom_call.1} parent=39 // pred_fallthru
          _
        // Predicated region
        $region49: #{tpu_custom_call.1} parent=39 // pred_check
          %p254 = pneg %p107
        $region50: #{tpu_custom_call.1} parent=39 // pred_check_branch
          %256 = sbr.rel (%p254) target = $region52
        $region51: #{tpu_custom_call.1} parent=39 // pred_region
          %257 = dma.done [#allocation6], 2048
        $region52: #{tpu_custom_call.1} parent=39 // pred_fallthru
          _
        %s258 = sand.u32 %s31, 1
        %s259 = scalar_lea.sflag [#allocation3], %s258
        %s260 = sand.u32 %s31, 1
        %s261 = smul.addr %s260, 208
        %s262 = scalar_lea.vmem [#allocation2], %s261
        %p263 = pneg %p44
        %p264 = pneg %p41
        %p265 = pneg %p65
        %p266 = pneg %p62
        %p267 = pneg %p86
        %p268 = pneg %p83
        %p269 = pneg %p107
        %p270 = pneg %p104
        %p271 = pneg %p128
        %p272 = pneg %p125
        %p273 = pneg %p154
        %p274 = pneg %p151
        %s275 = sand.u32 %s141, 1
        %s276 = scalar_lea.sflag [#allocation4], %s275
        %s277 = sand.u32 %s141, 1
        %s278 = smul.addr %s277, 104
        %s279 = scalar_lea.vmem [#allocation8], %s278
        %s280 = smul.u32 13, %s23
        %s281 = ssub.s32 25, %s280
        %p282 = scmp.lt.s32.totalorder %s281, 13
        %s283 = scalar_select %p282, %s281, 13
        %s284 = smul.u32 128, %s283
        %s285 = smul.u32 %s284, 2
        %s286 = smul.u32 13, %s23
        %s287 = ssub.s32 25, %s286
        %p288 = scmp.lt.s32.totalorder %s287, 13
        %s289 = scalar_select %p288, %s287, 13
        %s290 = smul.u32 128, %s289
        %v291 = vld [vmem:[%s245] sm:$0xff]
        %v292 = vld [vmem:[%s245 + $0x8] sm:$0xff]
        %v293 = vld [vmem:[%s245 + $0x10] sm:$0xff]
        %v294 = vld [vmem:[%s245 + $0x18] sm:$0xff]
        %v295 = vld [vmem:[%s245 + $0x20] sm:$0xff]
        %v296 = vld [vmem:[%s245 + $0x28] sm:$0xff]
        %v297 = vld [vmem:[%s245 + $0x30] sm:$0xff]
        %v298 = vld [vmem:[%s245 + $0x38] sm:$0xff]
        %v299 = vld [vmem:[%s245 + $0x40] sm:$0xff]
        %v300 = vld [vmem:[%s245 + $0x48] sm:$0xff]
        %v301 = vld [vmem:[%s245 + $0x50] sm:$0xff]
        %v302 = vld [vmem:[%s245 + $0x58] sm:$0xff]
        %v303 = vld [vmem:[%s245 + $0x60] sm:$0xff]
        %v304 = vld [vmem:[%s245 + $0x68] sm:$0xff]
        %v305 = vld [vmem:[%s245 + $0x70] sm:$0xff]
        %v306 = vld [vmem:[%s245 + $0x78] sm:$0xff]
        %v307 = vld [vmem:[%s245 + $0x80] sm:$0xff]
        %v308 = vld [vmem:[%s245 + $0x88] sm:$0xff]
        %v309 = vld [vmem:[%s245 + $0x90] sm:$0xff]
        %v310 = vld [vmem:[%s245 + $0x98] sm:$0xff]
        %v311 = vld [vmem:[%s245 + $0xa0] sm:$0xff]
        %v312 = vld [vmem:[%s245 + $0xa8] sm:$0xff]
        %v313 = vld [vmem:[%s245 + $0xb0] sm:$0xff]
        %v314 = vld [vmem:[%s245 + $0xb8] sm:$0xff]
        %v315 = vld [vmem:[%s245 + $0xc0] sm:$0xff]
        %v316 = vld [vmem:[%s245 + $0xc8] sm:$0xff]
        %v317 = vld [vmem:[#allocation5] sm:$0xff]
        %v318 = vld [vmem:[#allocation5 + $0x8] sm:$0xff]
        %v319 = vld [vmem:[#allocation5 + $0x10] sm:$0xff]
        %v320 = vld [vmem:[#allocation5 + $0x18] sm:$0xff]
        %v321 = vld [vmem:[#allocation5 + $0x20] sm:$0xff]
        %v322 = vld [vmem:[#allocation5 + $0x28] sm:$0xff]
        %v323 = vld [vmem:[#allocation5 + $0x30] sm:$0xff]
        %v324 = vld [vmem:[#allocation5 + $0x38] sm:$0xff]
        %v325 = vld [vmem:[#allocation5 + $0x40] sm:$0xff]
        %v326 = vld [vmem:[#allocation5 + $0x48] sm:$0xff]
        %v327 = vld [vmem:[#allocation5 + $0x50] sm:$0xff]
        %v328 = vld [vmem:[#allocation5 + $0x58] sm:$0xff]
        %v329 = vld [vmem:[#allocation5 + $0x60] sm:$0xff]
        %v330 = vld [vmem:[#allocation5 + $0x68] sm:$0xff]
        %v331 = vld [vmem:[#allocation5 + $0x70] sm:$0xff]
        %v332 = vld [vmem:[#allocation5 + $0x78] sm:$0xff]
        %v333 = vld [vmem:[#allocation5 + $0x80] sm:$0xff]
        %v334 = vld [vmem:[#allocation5 + $0x88] sm:$0xff]
        %v335 = vld [vmem:[#allocation5 + $0x90] sm:$0xff]
        %v336 = vld [vmem:[#allocation5 + $0x98] sm:$0xff]
        %v337 = vld [vmem:[#allocation5 + $0xa0] sm:$0xff]
        %v338 = vld [vmem:[#allocation5 + $0xa8] sm:$0xff]
        %v339 = vld [vmem:[#allocation5 + $0xb0] sm:$0xff]
        %v340 = vld [vmem:[#allocation5 + $0xb8] sm:$0xff]
        %v341 = vld [vmem:[#allocation5 + $0xc0] sm:$0xff]
        %v342 = vld [vmem:[#allocation5 + $0xc8] sm:$0xff]
        %v343 = vld [vmem:[#allocation5 + $0xd0] sm:$0xff]
        %v344 = vld [vmem:[#allocation5 + $0xd8] sm:$0xff]
        %v345 = vld [vmem:[#allocation5 + $0xe0] sm:$0xff]
        %v346 = vld [vmem:[#allocation5 + $0xe8] sm:$0xff]
        %v347 = vld [vmem:[#allocation5 + $0xf0] sm:$0xff]
        %v348 = vld [vmem:[#allocation5 + $0xf8] sm:$0xff]
        %v349 = vld [vmem:[%s2] sm:$0x1]
        %v351 = vlaneseq
        %v352 = vshrl.u32 %v351, 7
        %v353 = vsub.s32 0, %v352
        %v354 = vrot.slane %v349, %v353
        %356 = vmatprep.subr.mxu0 0.0
        %357 = vmatpush1.msra.mxu0 %v317
        %358 = vmatprep.subr.mxu0 0.0
        %359 = vmatpush1.msra.mxu0 %v318
        %360 = vmatprep.subr.mxu0 0.0
        %361 = vmatpush1.msra.mxu0 %v319
        %362 = vmatprep.subr.mxu0 0.0
        %363 = vmatpush1.msra.mxu0 %v320
        %364 = vmatprep.subr.mxu0 0.0
        %365 = vmatpush1.msra.mxu0 %v321
        %366 = vmatprep.subr.mxu0 0.0
        %367 = vmatpush1.msra.mxu0 %v322
        %368 = vmatprep.subr.mxu0 0.0
        %369 = vmatpush1.msra.mxu0 %v323
        %370 = vmatprep.subr.mxu0 0.0
        %371 = vmatpush1.msra.mxu0 %v324
        %372 = vmatprep.subr.mxu0 0.0
        %373 = vmatpush1.msra.mxu0 %v325
        %374 = vmatprep.subr.mxu0 0.0
        %375 = vmatpush1.msra.mxu0 %v326
        %376 = vmatprep.subr.mxu0 0.0
        %377 = vmatpush1.msra.mxu0 %v327
        %378 = vmatprep.subr.mxu0 0.0
        %379 = vmatpush1.msra.mxu0 %v328
        %380 = vmatprep.subr.mxu0 0.0
        %381 = vmatpush1.msra.mxu0 %v329
        %382 = vmatprep.subr.mxu0 0.0
        %383 = vmatpush1.msra.mxu0 %v330
        %384 = vmatprep.subr.mxu0 0.0
        %385 = vmatpush1.msra.mxu0 %v331
        %386 = vmatprep.subr.mxu0 0.0
        %387 = vmatpush1.msra.mxu0 %v332
        %388 = vmatprep.subr.mxu0 0.0
        %389 = vmatpush1.msra.mxu0 %v333
        %390 = vmatprep.subr.mxu0 0.0
        %391 = vmatpush1.msra.mxu0 %v334
        %392 = vmatprep.subr.mxu0 0.0
        %393 = vmatpush1.msra.mxu0 %v335
        %394 = vmatprep.subr.mxu0 0.0
        %395 = vmatpush1.msra.mxu0 %v336
        %396 = vmatprep.subr.mxu0 0.0
        %397 = vmatpush1.msra.mxu0 %v337
        %398 = vmatprep.subr.mxu0 0.0
        %399 = vmatpush1.msra.mxu0 %v338
        %400 = vmatprep.subr.mxu0 0.0
        %401 = vmatpush1.msra.mxu0 %v339
        %402 = vmatprep.subr.mxu0 0.0
        %403 = vmatpush1.msra.mxu0 %v340
        %404 = vmatprep.subr.mxu0 0.0
        %405 = vmatpush1.msra.mxu0 %v341
        %406 = vmatprep.subr.mxu0 0.0
        %407 = vmatpush1.msra.mxu0 %v342
        %408 = vmatprep.subr.mxu0 0.0
        %409 = vmatpush1.msra.mxu0 %v343
        %410 = vmatprep.subr.mxu0 0.0
        %411 = vmatpush1.msra.mxu0 %v344
        %412 = vmatprep.subr.mxu0 0.0
        %413 = vmatpush1.msra.mxu0 %v345
        %414 = vmatprep.subr.mxu0 0.0
        %415 = vmatpush1.msra.mxu0 %v346
        %416 = vmatprep.subr.mxu0 0.0
        %417 = vmatpush1.msra.mxu0 %v347
        %418 = vmatprep.subr.mxu0 0.0
        %419 = vmatpush1.msra.mxu0 %v348
        %420 = vmatprep.mubr.f32.mxu0 %v292
        %421 = vmatmul.mubr.f32.gmra.mrb[0].mxu0 %v291
        %v422 = vpop.f32.mrb[0].mxu0
        %v423 = vadd.f32 %v354, %v422
        %v424 = vpop.f32.mrb[0].mxu0
        %425 = vmatprep.mubr.f32.mxu0 %v294
        %426 = vmatmul.mubr.f32.gmra.mrb[0].mxu0 %v293
        %v427 = vpop.f32.mrb[0].mxu0
        %v428 = vadd.f32 %v354, %v427
        %v429 = vpop.f32.mrb[0].mxu0
        %430 = vmatprep.mubr.f32.mxu0 %v296
        %431 = vmatmul.mubr.f32.gmra.mrb[0].mxu0 %v295
        %v432 = vpop.f32.mrb[0].mxu0
        %v433 = vadd.f32 %v354, %v432
        %v434 = vpop.f32.mrb[0].mxu0
        %435 = vmatprep.mubr.f32.mxu0 %v298
        %436 = vmatmul.mubr.f32.gmra.mrb[0].mxu0 %v297
        %v437 = vpop.f32.mrb[0].mxu0
        %v438 = vadd.f32 %v354, %v437
        %v439 = vpop.f32.mrb[0].mxu0
        %440 = vmatprep.mubr.f32.mxu0 %v300
        %441 = vmatmul.mubr.f32.gmra.mrb[0].mxu0 %v299
        %v442 = vpop.f32.mrb[0].mxu0
        %v443 = vadd.f32 %v354, %v442
        %v444 = vpop.f32.mrb[0].mxu0
        %445 = vmatprep.mubr.f32.mxu0 %v302
        %446 = vmatmul.mubr.f32.gmra.mrb[0].mxu0 %v301
        %v447 = vpop.f32.mrb[0].mxu0
        %v448 = vadd.f32 %v354, %v447
        %v449 = vpop.f32.mrb[0].mxu0
        %450 = vmatprep.mubr.f32.mxu0 %v304
        %451 = vmatmul.mubr.f32.gmra.mrb[0].mxu0 %v303
        %v452 = vpop.f32.mrb[0].mxu0
        %v453 = vadd.f32 %v354, %v452
        %v454 = vpop.f32.mrb[0].mxu0
        %455 = vmatprep.mubr.f32.mxu0 %v306
        %456 = vmatmul.mubr.f32.gmra.mrb[0].mxu0 %v305
        %v457 = vpop.f32.mrb[0].mxu0
        %v458 = vadd.f32 %v354, %v457
        %v459 = vpop.f32.mrb[0].mxu0
        %460 = vmatprep.mubr.f32.mxu0 %v308
        %461 = vmatmul.mubr.f32.gmra.mrb[0].mxu0 %v307
        %v462 = vpop.f32.mrb[0].mxu0
        %v463 = vadd.f32 %v354, %v462
        %v464 = vpop.f32.mrb[0].mxu0
        %465 = vmatprep.mubr.f32.mxu0 %v310
        %466 = vmatmul.mubr.f32.gmra.mrb[0].mxu0 %v309
        %v467 = vpop.f32.mrb[0].mxu0
        %v468 = vadd.f32 %v354, %v467
        %v469 = vpop.f32.mrb[0].mxu0
        %470 = vmatprep.mubr.f32.mxu0 %v312
        %471 = vmatmul.mubr.f32.gmra.mrb[0].mxu0 %v311
        %v472 = vpop.f32.mrb[0].mxu0
        %v473 = vadd.f32 %v354, %v472
        %v474 = vpop.f32.mrb[0].mxu0
        %475 = vmatprep.mubr.f32.mxu0 %v314
        %476 = vmatmul.mubr.f32.gmra.mrb[0].mxu0 %v313
        %v477 = vpop.f32.mrb[0].mxu0
        %v478 = vadd.f32 %v354, %v477
        %v479 = vpop.f32.mrb[0].mxu0
        %480 = vmatprep.mubr.f32.mxu0 %v316
        %481 = vmatmul.mubr.f32.gmra.mrb[0].mxu0 %v315
        %v482 = vpop.f32.mrb[0].mxu0
        %v483 = vadd.f32 %v354, %v482
        %v484 = vpop.f32.mrb[0].mxu0
        %485 = vdwg.mxu0
        %v486 = vmax.f32 %v423, 0.0
        %v487 = vmax.f32 %v428, 0.0
        %v488 = vmax.f32 %v433, 0.0
        %v489 = vmax.f32 %v438, 0.0
        %v490 = vmax.f32 %v443, 0.0
        %v491 = vmax.f32 %v448, 0.0
        %v492 = vmax.f32 %v453, 0.0
        %v493 = vmax.f32 %v458, 0.0
        %v494 = vmax.f32 %v463, 0.0
        %v495 = vmax.f32 %v468, 0.0
        %v496 = vmax.f32 %v473, 0.0
        %v497 = vmax.f32 %v478, 0.0
        %v498 = vmax.f32 %v483, 0.0
        %v499 = vld [vmem:[#allocation7] sm:$0xff]
        %v500 = vld [vmem:[#allocation7 + $0x8] sm:$0xff]
        %v501 = vld [vmem:[#allocation7 + $0x10] sm:$0xff]
        %v502 = vld [vmem:[#allocation7 + $0x18] sm:$0xff]
        %v503 = vld [vmem:[#allocation7 + $0x20] sm:$0xff]
        %v504 = vld [vmem:[#allocation7 + $0x28] sm:$0xff]
        %v505 = vld [vmem:[#allocation7 + $0x30] sm:$0xff]
        %v506 = vld [vmem:[#allocation7 + $0x38] sm:$0xff]
        %v507 = vld [vmem:[#allocation7 + $0x40] sm:$0xff]
        %v508 = vld [vmem:[#allocation7 + $0x48] sm:$0xff]
        %v509 = vld [vmem:[#allocation7 + $0x50] sm:$0xff]
        %v510 = vld [vmem:[#allocation7 + $0x58] sm:$0xff]
        %v511 = vld [vmem:[#allocation7 + $0x60] sm:$0xff]
        %v512 = vld [vmem:[#allocation7 + $0x68] sm:$0xff]
        %v513 = vld [vmem:[#allocation7 + $0x70] sm:$0xff]
        %v514 = vld [vmem:[#allocation7 + $0x78] sm:$0xff]
        %v515 = vld [vmem:[%s4] sm:$0x1]
        %v517 = vlaneseq
        %v518 = vshrl.u32 %v517, 7
        %v519 = vsub.s32 0, %v518
        %v520 = vrot.slane %v515, %v519
        %522 = vmatprep.subr.mxu0 0.0
        %523 = vmatpush1.msra.mxu0 %v499
        %524 = vmatprep.subr.mxu0 0.0
        %525 = vmatpush1.msra.mxu0 %v500
        %526 = vmatprep.subr.mxu0 0.0
        %527 = vmatpush1.msra.mxu0 %v501
        %528 = vmatprep.subr.mxu0 0.0
        %529 = vmatpush1.msra.mxu0 %v502
        %530 = vmatprep.subr.mxu0 0.0
        %531 = vmatpush1.msra.mxu0 %v503
        %532 = vmatprep.subr.mxu0 0.0
        %533 = vmatpush1.msra.mxu0 %v504
        %534 = vmatprep.subr.mxu0 0.0
        %535 = vmatpush1.msra.mxu0 %v505
        %536 = vmatprep.subr.mxu0 0.0
        %537 = vmatpush1.msra.mxu0 %v506
        %538 = vmatprep.subr.mxu0 0.0
        %539 = vmatpush1.msra.mxu0 %v507
        %540 = vmatprep.subr.mxu0 0.0
        %541 = vmatpush1.msra.mxu0 %v508
        %542 = vmatprep.subr.mxu0 0.0
        %543 = vmatpush1.msra.mxu0 %v509
        %544 = vmatprep.subr.mxu0 0.0
        %545 = vmatpush1.msra.mxu0 %v510
        %546 = vmatprep.subr.mxu0 0.0
        %547 = vmatpush1.msra.mxu0 %v511
        %548 = vmatprep.subr.mxu0 0.0
        %549 = vmatpush1.msra.mxu0 %v512
        %550 = vmatprep.subr.mxu0 0.0
        %551 = vmatpush1.msra.mxu0 %v513
        %552 = vmatprep.subr.mxu0 0.0
        %553 = vmatpush1.msra.mxu0 %v514
        %554 = vmatprep.subr.mxu0 0.0
        %555 = vmatpush1.msra.mxu0 0.0
        %556 = vmatprep.subr.mxu0 0.0
        %557 = vmatpush1.msra.mxu0 0.0
        %558 = vmatprep.subr.mxu0 0.0
        %559 = vmatpush1.msra.mxu0 0.0
        %560 = vmatprep.subr.mxu0 0.0
        %561 = vmatpush1.msra.mxu0 0.0
        %562 = vmatprep.subr.mxu0 0.0
        %563 = vmatpush1.msra.mxu0 0.0
        %564 = vmatprep.subr.mxu0 0.0
        %565 = vmatpush1.msra.mxu0 0.0
        %566 = vmatprep.subr.mxu0 0.0
        %567 = vmatpush1.msra.mxu0 0.0
        %568 = vmatprep.subr.mxu0 0.0
        %569 = vmatpush1.msra.mxu0 0.0
        %570 = vmatprep.subr.mxu0 0.0
        %571 = vmatpush1.msra.mxu0 0.0
        %572 = vmatprep.subr.mxu0 0.0
        %573 = vmatpush1.msra.mxu0 0.0
        %574 = vmatprep.subr.mxu0 0.0
        %575 = vmatpush1.msra.mxu0 0.0
        %576 = vmatprep.subr.mxu0 0.0
        %577 = vmatpush1.msra.mxu0 0.0
        %578 = vmatprep.subr.mxu0 0.0
        %579 = vmatpush1.msra.mxu0 0.0
        %580 = vmatprep.subr.mxu0 0.0
        %581 = vmatpush1.msra.mxu0 0.0
        %582 = vmatprep.subr.mxu0 0.0
        %583 = vmatpush1.msra.mxu0 0.0
        %584 = vmatprep.subr.mxu0 0.0
        %585 = vmatpush1.msra.mxu0 0.0
        %586 = vmatprep.mubr.f32.mxu0 0.0
        %587 = vmatmul.mubr.f32.gmra.mrb[0].mxu0 %v486
        %v588 = vpop.f32.mrb[0].mxu0
        %v589 = vadd.f32 %v520, %v588
        %v590 = vpop.f32.mrb[0].mxu0
        %591 = vmatprep.mubr.f32.mxu0 0.0
        %592 = vmatmul.mubr.f32.gmra.mrb[0].mxu0 %v487
        %v593 = vpop.f32.mrb[0].mxu0
        %v594 = vadd.f32 %v520, %v593
        %v595 = vpop.f32.mrb[0].mxu0
        %596 = vmatprep.mubr.f32.mxu0 0.0
        %597 = vmatmul.mubr.f32.gmra.mrb[0].mxu0 %v488
        %v598 = vpop.f32.mrb[0].mxu0
        %v599 = vadd.f32 %v520, %v598
        %v600 = vpop.f32.mrb[0].mxu0
        %601 = vmatprep.mubr.f32.mxu0 0.0
        %602 = vmatmul.mubr.f32.gmra.mrb[0].mxu0 %v489
        %v603 = vpop.f32.mrb[0].mxu0
        %v604 = vadd.f32 %v520, %v603
        %v605 = vpop.f32.mrb[0].mxu0
        %606 = vmatprep.mubr.f32.mxu0 0.0
        %607 = vmatmul.mubr.f32.gmra.mrb[0].mxu0 %v490
        %v608 = vpop.f32.mrb[0].mxu0
        %v609 = vadd.f32 %v520, %v608
        %v610 = vpop.f32.mrb[0].mxu0
        %611 = vmatprep.mubr.f32.mxu0 0.0
        %612 = vmatmul.mubr.f32.gmra.mrb[0].mxu0 %v491
        %v613 = vpop.f32.mrb[0].mxu0
        %v614 = vadd.f32 %v520, %v613
        %v615 = vpop.f32.mrb[0].mxu0
        %616 = vmatprep.mubr.f32.mxu0 0.0
        %617 = vmatmul.mubr.f32.gmra.mrb[0].mxu0 %v492
        %v618 = vpop.f32.mrb[0].mxu0
        %v619 = vadd.f32 %v520, %v618
        %v620 = vpop.f32.mrb[0].mxu0
        %621 = vmatprep.mubr.f32.mxu0 0.0
        %622 = vmatmul.mubr.f32.gmra.mrb[0].mxu0 %v493
        %v623 = vpop.f32.mrb[0].mxu0
        %v624 = vadd.f32 %v520, %v623
        %v625 = vpop.f32.mrb[0].mxu0
        %626 = vmatprep.mubr.f32.mxu0 0.0
        %627 = vmatmul.mubr.f32.gmra.mrb[0].mxu0 %v494
        %v628 = vpop.f32.mrb[0].mxu0
        %v629 = vadd.f32 %v520, %v628
        %v630 = vpop.f32.mrb[0].mxu0
        %631 = vmatprep.mubr.f32.mxu0 0.0
        %632 = vmatmul.mubr.f32.gmra.mrb[0].mxu0 %v495
        %v633 = vpop.f32.mrb[0].mxu0
        %v634 = vadd.f32 %v520, %v633
        %v635 = vpop.f32.mrb[0].mxu0
        %636 = vmatprep.mubr.f32.mxu0 0.0
        %637 = vmatmul.mubr.f32.gmra.mrb[0].mxu0 %v496
        %v638 = vpop.f32.mrb[0].mxu0
        %v639 = vadd.f32 %v520, %v638
        %v640 = vpop.f32.mrb[0].mxu0
        %641 = vmatprep.mubr.f32.mxu0 0.0
        %642 = vmatmul.mubr.f32.gmra.mrb[0].mxu0 %v497
        %v643 = vpop.f32.mrb[0].mxu0
        %v644 = vadd.f32 %v520, %v643
        %v645 = vpop.f32.mrb[0].mxu0
        %646 = vmatprep.mubr.f32.mxu0 0.0
        %647 = vmatmul.mubr.f32.gmra.mrb[0].mxu0 %v498
        %v648 = vpop.f32.mrb[0].mxu0
        %v649 = vadd.f32 %v520, %v648
        %v650 = vpop.f32.mrb[0].mxu0
        %651 = vdwg.mxu0
        %652 = vst [vmem:[%s279] sm:$0xff] %v589
        %653 = vst [vmem:[%s279 + $0x8] sm:$0xff] %v594
        %654 = vst [vmem:[%s279 + $0x10] sm:$0xff] %v599
        %655 = vst [vmem:[%s279 + $0x18] sm:$0xff] %v604
        %656 = vst [vmem:[%s279 + $0x20] sm:$0xff] %v609
        %657 = vst [vmem:[%s279 + $0x28] sm:$0xff] %v614
        %658 = vst [vmem:[%s279 + $0x30] sm:$0xff] %v619
        %659 = vst [vmem:[%s279 + $0x38] sm:$0xff] %v624
        %660 = vst [vmem:[%s279 + $0x40] sm:$0xff] %v629
        %661 = vst [vmem:[%s279 + $0x48] sm:$0xff] %v634
        %662 = vst [vmem:[%s279 + $0x50] sm:$0xff] %v639
        %663 = vst [vmem:[%s279 + $0x58] sm:$0xff] %v644
        %664 = vst [vmem:[%s279 + $0x60] sm:$0xff] %v649
        %s665 = sand.u32 %s141, 1
        %s666 = scalar_lea.sflag [#allocation4], %s665
        %s667 = sand.u32 %s141, 1
        %s668 = smul.addr %s667, 104
        %s669 = scalar_lea.vmem [#allocation8], %s668
        // Predicated region
        $region53: #{tpu_custom_call.1} parent=39 // pred_check
          %p670 = pneg %p151
        $region54: #{tpu_custom_call.1} parent=39 // pred_check_branch
          %672 = sbr.rel (%p670) target = $region56
        $region55: #{tpu_custom_call.1} parent=39 // pred_region
          %s673 = smul.u32 13, %s23
          %s674 = ssub.s32 25, %s673
          %p675 = scmp.lt.s32.totalorder %s674, 13
          %s676 = scalar_select %p675, %s674, 13
          %s677 = smul.u32 128, %s676
          %s679 = ssub.s32 1664, %s677
          %680 = vsyncadd %s666, %s679
          %p681 = scmp.ne.s32.totalorder 0, %s677
          %s682 = smul.addr %s673, 128
          %s683 = scalar_lea.hbm %s5, %s682
          %s684 = smul.u32 8, %s676
          %s685 = sshll.u32 %s669, 4
          %s686 = int_to_ptr.vmem [resolvable:$true] %s685
          %s687 = sshll.u32 %s684, 4
          %691 = dma.vmem_to_hbm [thread:$0]  (%p681), %s686, %s687, %s683, %s666, 128, 128, 8
        $region56: #{tpu_custom_call.1} parent=39 // pred_fallthru
          _
      $region40: #{tpu_custom_call.1} parent=5 // pred_fallthru
        _
      %p692 = scmp.le.s32.totalorder 2, %s18
      // Predicated region
      $region57: #{tpu_custom_call.1} parent=5 // pred_check
        %p693 = pneg %p692
      $region58: #{tpu_custom_call.1} parent=5 // pred_check_branch
        %695 = sbr.rel (%p693) target = $region60
      $region59: #{tpu_custom_call.1} parent=5 // pred_region
        %s696 = ssub.s32 %s18, 2
        // Predicated region
        $region61: #{tpu_custom_call.1} parent=59 // pred_check
          %p697 = pneg %p157
        $region62: #{tpu_custom_call.1} parent=59 // pred_check_branch
          %699 = sbr.rel (%p697) target = $region64
        $region63: #{tpu_custom_call.1} parent=59 // pred_region
          %s700 = sand.u32 %s142, 1
          %s701 = scalar_lea.sflag [#allocation4], %s700
          %s702 = sand.u32 %s142, 1
          %s703 = smul.addr %s702, 104
          %s704 = scalar_lea.vmem [#allocation8], %s703
          %705 = dma.done %s701, 1664
        $region64: #{tpu_custom_call.1} parent=59 // pred_fallthru
          _
      $region60: #{tpu_custom_call.1} parent=5 // pred_fallthru
        _
    $region6: #{tpu_custom_call.1} parent=1 // loop_footer
      %s22 = sadd.s32 1, %s18
    $region7: #{tpu_custom_call.1} parent=1 // loop_footer_branch
      %17 = sbr.rel target = $region3
    $region8: #{tpu_custom_call.1} parent=1 // loop_exit
      _
    %706 = vsyncpa [#allocation3], 1
    %s707 = scalar_lea.sflag [#allocation3], 1
    %708 = vsyncpa %s707, 1
    %709 = vsyncpa [#allocation6], 1
    %710 = vsyncpa [#allocation4], 1
    %s711 = scalar_lea.sflag [#allocation4], 1
    %712 = vsyncpa %s711, 1

</llo_original>
